<compile_context>
chip_gen: v6e
topology: v6e:2x2x1
jax: 0.10.0
libtpu: 0.0.40
codegen_flags: <defaults>
</compile_context>

<pallas_src>
import numpy as np
import jax
import jax.numpy as jnp
from jax import lax
from jax.experimental import pallas as pl
from jax.experimental.pallas import tpu as pltpu

SEQ_LEN = 12    # seq_len == pred_len == channel == 12 (required by the module)
CHANNEL = 12
EPS = 1e-6      # nn.LayerNorm(seq_len, eps=1e-06)


def _cdiv(a, b):
    return -(-a // b)


def dct_matrix(n):
    # D[k, m] = 2 * cos(pi * (m + 0.5) * k / n)   (DCT-II, norm=None)
    k = np.arange(n)[:, None]
    m = np.arange(n)[None, :]
    return (2.0 * np.cos(np.pi * (m + 0.5) * k / n)).astype(np.float32)


def _choose_tiling(m, max_tile_m):
    """Return (mt, m_total): lane-tile size and padded lane extent."""
    n = _cdiv(m, 128)                       # 128-lane blocks of real work
    cap = max(1, max_tile_m // 128)         # max blocks per tile
    num_tiles = _cdiv(n, cap)
    # Give the second TensorCore (v7x megacore) work when there is enough of it.
    if n >= 64:                             # >= 8192 real lanes
        if num_tiles < 2:
            num_tiles = 2
        if num_tiles % 2:
            num_tiles += 1
    bpt = _cdiv(n, num_tiles)
    mt = bpt * 128
    return mt, mt * num_tiles


def _model_kernel(x_ref, dctc_ref, ones_ref, w1g_ref, b1_ref, w2_ref,
                  gamma_ref, beta_ref, wlin_ref, blin_ref, o_ref):
    # x: (L, MT) -- one (batch, channel) length-L series per lane (lane-dense).
    x = x_ref[...]
    ones_over_l = ones_ref[...]                                              # (1, L), 1/L

    # DCT-II with the LayerNorm-1 mean-centering folded into the matrix:
    #   d1 = (D - 1 * mean_row(D)) @ x  ==  dct(x) - mean(dct(x), axis=L)
    d1 = jnp.dot(dctc_ref[...], x, preferred_element_type=jnp.float32)       # (L, MT)
    var1 = jnp.dot(ones_over_l, d1 * d1, preferred_element_type=jnp.float32) # (1, MT)
    s_hat = d1 * lax.rsqrt(var1 + EPS)                                       # (L, MT)

    # fc: Linear(C,2C,no bias) -> Dropout(eval:id) -> ReLU -> Linear(2C,C,no bias) -> Sigmoid
    # LN1 affine (gamma, beta) is folded into w1g / b1 on the host.
    h = jnp.maximum(
        jnp.dot(w1g_ref[...], s_hat, preferred_element_type=jnp.float32)
        + b1_ref[...], 0.0)                                                  # (2L, MT)
    f_pre = jax.nn.sigmoid(
        jnp.dot(w2_ref[...], h, preferred_element_type=jnp.float32))         # (L, MT)

    # LayerNorm #2 (same gamma/beta), statistics via MXU ones-contractions.
    mu2 = jnp.dot(ones_over_l, f_pre, preferred_element_type=jnp.float32)    # (1, MT)
    d2 = f_pre - mu2
    var2 = jnp.dot(ones_over_l, d2 * d2, preferred_element_type=jnp.float32)
    f = d2 * lax.rsqrt(var2 + EPS) * gamma_ref[...] + beta_ref[...]          # (L, MT)

    # result = Linear(seq_len -> pred_len)(x * f)
    y = jnp.dot(wlin_ref[...], x * f, preferred_element_type=jnp.float32) \
        + blin_ref[...]
    o_ref[...] = y.astype(o_ref.dtype)


def make_params(key, channel=CHANNEL, seq_len=SEQ_LEN):
    k1, k2, k3, k4, k5, k6 = jax.random.split(key, 6)

    def unif(k, shape, fan_in):
        bound = 1.0 / np.sqrt(fan_in)
        return jax.random.uniform(k, shape, jnp.float32, -bound, bound)

    return dict(
        w1=unif(k1, (2 * channel, channel), channel),        # fc[0].weight
        w2=unif(k2, (channel, 2 * channel), 2 * channel),    # fc[3].weight
        wlin=unif(k3, (seq_len, seq_len), seq_len),          # Linear.weight
        blin=unif(k4, (seq_len,), seq_len),                  # Linear.bias
        gamma=1.0 + 0.05 * jax.random.normal(k5, (seq_len,), jnp.float32),
        beta=0.05 * jax.random.normal(k6, (seq_len,), jnp.float32),
    )


def model_forward(x, params, max_tile_m=16384):
    B, L, C = x.shape
    assert L == SEQ_LEN and C == CHANNEL
    M = B * C

    mt, m_total = _choose_tiling(M, max_tile_m)

    # (B, L, C) -> (L, B*C): lane-dense working layout.  Materialized by a
    # standalone XLA transpose (contiguous writes) so the kernel's x DMAs are
    # long bursts, not 48-byte strided granules.
    xt = jnp.transpose(x, (1, 0, 2)).reshape(L, M).astype(jnp.float32)
    if m_total > M:
        xt = jnp.pad(xt, ((0, 0), (0, m_total - M)))

    gamma = params["gamma"].astype(jnp.float32)
    beta = params["beta"].astype(jnp.float32)
    w1 = params["w1"].astype(jnp.float32)                     # (2L, L)
    w2 = params["w2"].astype(jnp.float32)                     # (L, 2L)

    D = dct_matrix(L)
    dctc = jnp.asarray(D - D.mean(axis=0, keepdims=True))     # centered DCT basis

    consts = (
        dctc,                                                 # (L, L)
        jnp.full((1, L), 1.0 / L, jnp.float32),               # (1, L) ones/L
        w1 * gamma[None, :],                                  # (2L, L) LN1 affine folded
        (w1 @ beta).reshape(2 * L, 1),                        # (2L, 1)
        w2,                                                   # (L, 2L)
        gamma.reshape(L, 1),                                  # (L, 1)
        beta.reshape(L, 1),                                   # (L, 1)
        params["wlin"].astype(jnp.float32),                   # (L, L)
        params["blin"].astype(jnp.float32).reshape(L, 1),     # (L, 1)
    )

    grid = (m_total // mt,)
    x_spec = pl.BlockSpec((L, mt), lambda i: (0, i))
    const_specs = [pl.BlockSpec(c.shape, lambda i: (0, 0)) for c in consts]

    out = pl.pallas_call(
        _model_kernel,
        grid=grid,
        in_specs=[x_spec] + const_specs,
        out_specs=pl.BlockSpec((L, mt), lambda i: (0, i)),
        out_shape=jax.ShapeDtypeStruct((L, m_total), jnp.float32),
        compiler_params=pltpu.CompilerParams(
            dimension_semantics=("parallel",),
            vmem_limit_bytes=32 * 1024 * 1024,
        ),
    )(xt, *consts)

    # TODO(synk): this final re-layout is an extra HBM pass; keep the (L, B*C)
    # slab if the downstream consumer can accept that layout.
    y = out[:, :M].reshape(L, B, C)
    return jnp.transpose(y, (1, 0, 2))                        # (B, L, C)


def reference_forward(x, params):
    """Pure-JAX reference mirroring the PyTorch forward (eval mode)."""
    B, L, C = x.shape
    xp = jnp.transpose(x, (0, 2, 1))                          # (B, C, L)
    D = jnp.asarray(dct_matrix(L))
    freq = jnp.einsum('bcl,kl->bck', xp, D)

    def ln(v):
        mu = v.mean(-1, keepdims=True)
        var = ((v - mu) ** 2).mean(-1, keepdims=True)
        return (v - mu) / jnp.sqrt(var + EPS) * params["gamma"] + params["beta"]

    s = ln(freq)
    h = jnp.maximum(s @ params["w1"].T, 0.0)
    f = jax.nn.sigmoid(h @ params["w2"].T)
    f = ln(f)
    y = (xp * f) @ params["wlin"].T + params["blin"]
    return jnp.transpose(y, (0, 2, 1))


if __name__ == "__main__":
    key = jax.random.PRNGKey(0)
    kx, kx2, kp = jax.random.split(key, 3)
    params = make_params(kp)

    # Small case: single tile (M = 48 -> one 128-lane block, padded lanes).
    x_small = jax.random.normal(kx, (4, SEQ_LEN, CHANNEL), jnp.float32)
    out_small = jax.block_until_ready(model_forward(x_small, params))
    ref_small = reference_forward(x_small, params)
    assert out_small.shape == x_small.shape
    assert np.allclose(np.asarray(out_small), np.asarray(ref_small),
                       atol=1e-4, rtol=1e-4), "mismatch (small batch)"

    # Multi-tile grid path: M = 96*12 = 1152 lanes with a forced 512-lane cap
    # -> mt = 384, grid = (3,), zero padding.
    x_big = jax.random.normal(kx2, (96, SEQ_LEN, CHANNEL), jnp.float32)
    out_big = jax.block_until_ready(model_forward(x_big, params, max_tile_m=512))
    ref_big = reference_forward(x_big, params)
    assert out_big.shape == x_big.shape
    assert np.allclose(np.asarray(out_big), np.asarray(ref_big),
                       atol=1e-4, rtol=1e-4), "mismatch (multi-tile batch)"

    print("KERNEL_OK")
</pallas_src>

<mosaic_0001>
module attributes {stable_mosaic.version = 11 : i64} {
  func.func @_model_kernel(%arg0: i32, %arg1: memref<12x128xf32, #tpu.memory_space<vmem>>, %arg2: memref<12x12xf32, #tpu.memory_space<vmem>>, %arg3: memref<1x12xf32, #tpu.memory_space<vmem>>, %arg4: memref<24x12xf32, #tpu.memory_space<vmem>>, %arg5: memref<24x1xf32, #tpu.memory_space<vmem>>, %arg6: memref<12x24xf32, #tpu.memory_space<vmem>>, %arg7: memref<12x1xf32, #tpu.memory_space<vmem>>, %arg8: memref<12x1xf32, #tpu.memory_space<vmem>>, %arg9: memref<12x12xf32, #tpu.memory_space<vmem>>, %arg10: memref<12x1xf32, #tpu.memory_space<vmem>>, %arg11: memref<12x128xf32, #tpu.memory_space<vmem>>) attributes {dimension_semantics = [#tpu.dimension_semantics<parallel>], iteration_bounds = array<i64: 1>, scalar_prefetch = 0 : i64, scratch_operands = 0 : i64, tpu.core_type = #tpu.core_type<tc>, window_params = [{transform_indices = @transform_0, window_bounds = array<i64: 12, 128>}, {pipeline_mode = #tpu.pipeline_mode<synchronous>, transform_indices = @transform_1, window_bounds = array<i64: 12, 12>}, {pipeline_mode = #tpu.pipeline_mode<synchronous>, transform_indices = @transform_2, window_bounds = array<i64: 1, 12>}, {pipeline_mode = #tpu.pipeline_mode<synchronous>, transform_indices = @transform_3, window_bounds = array<i64: 24, 12>}, {pipeline_mode = #tpu.pipeline_mode<synchronous>, transform_indices = @transform_4, window_bounds = array<i64: 24, 1>}, {pipeline_mode = #tpu.pipeline_mode<synchronous>, transform_indices = @transform_5, window_bounds = array<i64: 12, 24>}, {pipeline_mode = #tpu.pipeline_mode<synchronous>, transform_indices = @transform_6, window_bounds = array<i64: 12, 1>}, {pipeline_mode = #tpu.pipeline_mode<synchronous>, transform_indices = @transform_7, window_bounds = array<i64: 12, 1>}, {pipeline_mode = #tpu.pipeline_mode<synchronous>, transform_indices = @transform_8, window_bounds = array<i64: 12, 12>}, {pipeline_mode = #tpu.pipeline_mode<synchronous>, transform_indices = @transform_9, window_bounds = array<i64: 12, 1>}, {transform_indices = @transform_10, window_bounds = array<i64: 12, 128>}]} {
    %c0 = arith.constant 0 : index
    %c0_0 = arith.constant 0 : index
    %0 = vector.load %arg1[%c0, %c0_0] : memref<12x128xf32, #tpu.memory_space<vmem>>, vector<12x128xf32>
    %c0_1 = arith.constant 0 : index
    %c0_2 = arith.constant 0 : index
    %1 = vector.load %arg3[%c0_1, %c0_2] : memref<1x12xf32, #tpu.memory_space<vmem>>, vector<1x12xf32>
    %c0_3 = arith.constant 0 : index
    %c0_4 = arith.constant 0 : index
    %2 = vector.load %arg2[%c0_3, %c0_4] : memref<12x12xf32, #tpu.memory_space<vmem>>, vector<12x12xf32>
    %cst = arith.constant dense<0.000000e+00> : vector<12x128xf32>
    %3 = tpu.matmul %2, %0, %cst {dimension_numbers = #tpu.dot_dimension_numbers<[1], [0], [0], [1], [0, 0, 1, 1], [], []>} : vector<12x12xf32>, vector<12x128xf32>, vector<12x128xf32> -> vector<12x128xf32>
    %4 = arith.mulf %3, %3 : vector<12x128xf32>
    %cst_5 = arith.constant dense<0.000000e+00> : vector<1x128xf32>
    %5 = tpu.matmul %1, %4, %cst_5 {dimension_numbers = #tpu.dot_dimension_numbers<[1], [0], [0], [1], [0, 0, 1, 1], [], []>} : vector<1x12xf32>, vector<12x128xf32>, vector<1x128xf32> -> vector<1x128xf32>
    %cst_6 = arith.constant 9.99999997E-7 : f32
    %6 = vector.broadcast %cst_6 : f32 to vector<1x128xf32>
    %7 = arith.addf %5, %6 : vector<1x128xf32>
    %8 = math.rsqrt %7 : vector<1x128xf32>
    %9 = vector.broadcast %8 : vector<1x128xf32> to vector<12x128xf32>
    %10 = arith.mulf %3, %9 : vector<12x128xf32>
    %c0_7 = arith.constant 0 : index
    %c0_8 = arith.constant 0 : index
    %11 = vector.load %arg4[%c0_7, %c0_8] : memref<24x12xf32, #tpu.memory_space<vmem>>, vector<24x12xf32>
    %cst_9 = arith.constant dense<0.000000e+00> : vector<24x128xf32>
    %12 = tpu.matmul %11, %10, %cst_9 {dimension_numbers = #tpu.dot_dimension_numbers<[1], [0], [0], [1], [0, 0, 1, 1], [], []>} : vector<24x12xf32>, vector<12x128xf32>, vector<24x128xf32> -> vector<24x128xf32>
    %c0_10 = arith.constant 0 : index
    %c0_11 = arith.constant 0 : index
    %13 = vector.load %arg5[%c0_10, %c0_11] : memref<24x1xf32, #tpu.memory_space<vmem>>, vector<24x1xf32>
    %14 = vector.broadcast %13 : vector<24x1xf32> to vector<24x128xf32>
    %15 = arith.addf %12, %14 : vector<24x128xf32>
    %cst_12 = arith.constant 0.000000e+00 : f32
    %16 = vector.broadcast %cst_12 : f32 to vector<24x128xf32>
    %17 = arith.maximumf %15, %16 : vector<24x128xf32>
    %c0_13 = arith.constant 0 : index
    %c0_14 = arith.constant 0 : index
    %18 = vector.load %arg6[%c0_13, %c0_14] : memref<12x24xf32, #tpu.memory_space<vmem>>, vector<12x24xf32>
    %cst_15 = arith.constant dense<0.000000e+00> : vector<12x128xf32>
    %19 = tpu.matmul %18, %17, %cst_15 {dimension_numbers = #tpu.dot_dimension_numbers<[1], [0], [0], [1], [0, 0, 1, 1], [], []>} : vector<12x24xf32>, vector<24x128xf32>, vector<12x128xf32> -> vector<12x128xf32>
    %20 = arith.negf %19 : vector<12x128xf32>
    %21 = math.exp %20 : vector<12x128xf32>
    %cst_16 = arith.constant 1.000000e+00 : f32
    %22 = vector.broadcast %cst_16 : f32 to vector<12x128xf32>
    %23 = arith.addf %22, %21 : vector<12x128xf32>
    %24 = arith.divf %22, %23 : vector<12x128xf32>
    %cst_17 = arith.constant dense<0.000000e+00> : vector<1x128xf32>
    %25 = tpu.matmul %1, %24, %cst_17 {dimension_numbers = #tpu.dot_dimension_numbers<[1], [0], [0], [1], [0, 0, 1, 1], [], []>} : vector<1x12xf32>, vector<12x128xf32>, vector<1x128xf32> -> vector<1x128xf32>
    %26 = vector.broadcast %25 : vector<1x128xf32> to vector<12x128xf32>
    %27 = arith.subf %24, %26 : vector<12x128xf32>
    %28 = arith.mulf %27, %27 : vector<12x128xf32>
    %cst_18 = arith.constant dense<0.000000e+00> : vector<1x128xf32>
    %29 = tpu.matmul %1, %28, %cst_18 {dimension_numbers = #tpu.dot_dimension_numbers<[1], [0], [0], [1], [0, 0, 1, 1], [], []>} : vector<1x12xf32>, vector<12x128xf32>, vector<1x128xf32> -> vector<1x128xf32>
    %cst_19 = arith.constant 9.99999997E-7 : f32
    %30 = vector.broadcast %cst_19 : f32 to vector<1x128xf32>
    %31 = arith.addf %29, %30 : vector<1x128xf32>
    %32 = math.rsqrt %31 : vector<1x128xf32>
    %33 = vector.broadcast %32 : vector<1x128xf32> to vector<12x128xf32>
    %34 = arith.mulf %27, %33 : vector<12x128xf32>
    %c0_20 = arith.constant 0 : index
    %c0_21 = arith.constant 0 : index
    %35 = vector.load %arg7[%c0_20, %c0_21] : memref<12x1xf32, #tpu.memory_space<vmem>>, vector<12x1xf32>
    %36 = vector.broadcast %35 : vector<12x1xf32> to vector<12x128xf32>
    %37 = arith.mulf %34, %36 : vector<12x128xf32>
    %c0_22 = arith.constant 0 : index
    %c0_23 = arith.constant 0 : index
    %38 = vector.load %arg8[%c0_22, %c0_23] : memref<12x1xf32, #tpu.memory_space<vmem>>, vector<12x1xf32>
    %39 = vector.broadcast %38 : vector<12x1xf32> to vector<12x128xf32>
    %40 = arith.addf %37, %39 : vector<12x128xf32>
    %c0_24 = arith.constant 0 : index
    %c0_25 = arith.constant 0 : index
    %41 = vector.load %arg9[%c0_24, %c0_25] : memref<12x12xf32, #tpu.memory_space<vmem>>, vector<12x12xf32>
    %42 = arith.mulf %0, %40 : vector<12x128xf32>
    %cst_26 = arith.constant dense<0.000000e+00> : vector<12x128xf32>
    %43 = tpu.matmul %41, %42, %cst_26 {dimension_numbers = #tpu.dot_dimension_numbers<[1], [0], [0], [1], [0, 0, 1, 1], [], []>} : vector<12x12xf32>, vector<12x128xf32>, vector<12x128xf32> -> vector<12x128xf32>
    %c0_27 = arith.constant 0 : index
    %c0_28 = arith.constant 0 : index
    %44 = vector.load %arg10[%c0_27, %c0_28] : memref<12x1xf32, #tpu.memory_space<vmem>>, vector<12x1xf32>
    %45 = vector.broadcast %44 : vector<12x1xf32> to vector<12x128xf32>
    %46 = arith.addf %43, %45 : vector<12x128xf32>
    %c0_29 = arith.constant 0 : index
    %c0_30 = arith.constant 0 : index
    %47 = vector.load %arg11[%c0_29, %c0_30] : memref<12x128xf32, #tpu.memory_space<vmem>>, vector<12x128xf32>
    tpu.vector_store %arg11[%c0_29, %c0_30], %46 {strides = array<i32>} : memref<12x128xf32, #tpu.memory_space<vmem>>, vector<12x128xf32>,
    return
  }
  func.func @transform_0(%arg0: i32) -> (i32, i32) {
    %c0_i32 = arith.constant 0 : i32
    %c0_i32_0 = arith.constant 0 : i32
    return %c0_i32, %arg0 : i32, i32
  }
  func.func @transform_1(%arg0: i32) -> (i32, i32) {
    %c0_i32 = arith.constant 0 : i32
    %c0_i32_0 = arith.constant 0 : i32
    %c0_i32_1 = arith.constant 0 : i32
    return %c0_i32, %c0_i32_0 : i32, i32
  }
  func.func @transform_2(%arg0: i32) -> (i32, i32) {
    %c0_i32 = arith.constant 0 : i32
    %c0_i32_0 = arith.constant 0 : i32
    %c0_i32_1 = arith.constant 0 : i32
    return %c0_i32, %c0_i32_0 : i32, i32
  }
  func.func @transform_3(%arg0: i32) -> (i32, i32) {
    %c0_i32 = arith.constant 0 : i32
    %c0_i32_0 = arith.constant 0 : i32
    %c0_i32_1 = arith.constant 0 : i32
    return %c0_i32, %c0_i32_0 : i32, i32
  }
  func.func @transform_4(%arg0: i32) -> (i32, i32) {
    %c0_i32 = arith.constant 0 : i32
    %c0_i32_0 = arith.constant 0 : i32
    %c0_i32_1 = arith.constant 0 : i32
    return %c0_i32, %c0_i32_0 : i32, i32
  }
  func.func @transform_5(%arg0: i32) -> (i32, i32) {
    %c0_i32 = arith.constant 0 : i32
    %c0_i32_0 = arith.constant 0 : i32
    %c0_i32_1 = arith.constant 0 : i32
    return %c0_i32, %c0_i32_0 : i32, i32
  }
  func.func @transform_6(%arg0: i32) -> (i32, i32) {
    %c0_i32 = arith.constant 0 : i32
    %c0_i32_0 = arith.constant 0 : i32
    %c0_i32_1 = arith.constant 0 : i32
    return %c0_i32, %c0_i32_0 : i32, i32
  }
  func.func @transform_7(%arg0: i32) -> (i32, i32) {
    %c0_i32 = arith.constant 0 : i32
    %c0_i32_0 = arith.constant 0 : i32
    %c0_i32_1 = arith.constant 0 : i32
    return %c0_i32, %c0_i32_0 : i32, i32
  }
  func.func @transform_8(%arg0: i32) -> (i32, i32) {
    %c0_i32 = arith.constant 0 : i32
    %c0_i32_0 = arith.constant 0 : i32
    %c0_i32_1 = arith.constant 0 : i32
    return %c0_i32, %c0_i32_0 : i32, i32
  }
  func.func @transform_9(%arg0: i32) -> (i32, i32) {
    %c0_i32 = arith.constant 0 : i32
    %c0_i32_0 = arith.constant 0 : i32
    %c0_i32_1 = arith.constant 0 : i32
    return %c0_i32, %c0_i32_0 : i32, i32
  }
  func.func @transform_10(%arg0: i32) -> (i32, i32) {
    %c0_i32 = arith.constant 0 : i32
    %c0_i32_0 = arith.constant 0 : i32
    return %c0_i32, %arg0 : i32, i32
  }
}

</mosaic_0001>

<llo_original>
// kernel: tpu_custom_call.1
$region0: #{tpu_custom_call.1}
  #allocation0 [shape = 'u32[]', space=smem, size = 0x4, offset = 0x4, fixed_abs, tag = 'smem constant byte address 0x4 - core index']
  #allocation1 [shape = 'u32[144,128]{1,0:T(1,128)}', space=vmem, size = 0x12000, scoped, tag = 'internal scratch']
  %s0 = inlined_call_operand.vmem [shape: f32[12,128], index: 0, kind: input, shape index: {}]
  %s1 = inlined_call_operand.vmem [shape: f32[12,12], index: 1, kind: input, shape index: {}]
  %s2 = inlined_call_operand.vmem [shape: f32[1,12], index: 2, kind: input, shape index: {}]
  %s3 = inlined_call_operand.vmem [shape: f32[24,12], index: 3, kind: input, shape index: {}]
  %s4 = inlined_call_operand.vmem [shape: f32[24,1], index: 4, kind: input, shape index: {}]
  %s5 = inlined_call_operand.vmem [shape: f32[12,24], index: 5, kind: input, shape index: {}]
  %s6 = inlined_call_operand.vmem [shape: f32[12,1], index: 6, kind: input, shape index: {}]
  %s7 = inlined_call_operand.vmem [shape: f32[12,1], index: 7, kind: input, shape index: {}]
  %s8 = inlined_call_operand.vmem [shape: f32[12,12], index: 8, kind: input, shape index: {}]
  %s9 = inlined_call_operand.vmem [shape: f32[12,1], index: 9, kind: input, shape index: {}]
  %s10 = inlined_call_operand.hbm [shape: f32[12,128], index: 10, kind: output, shape index: {}]
  %s11 = sld [smem:[#allocation0]]
  $region50: #{tpu_custom_call.1} parent=0
    _
  %s13 = ssub.s32 1, %s11
  %s14 = scalar_select 0, %s13, %s11
  $region1: #{tpu_custom_call.1} parent=0
    #allocation2 [shape = 'u8[8192]{0}', space=vmem, size = 0x2000, scoped, tag = 'output window, operand 0, single buffered']
    #allocation3 [shape = 's32[1]{0}', space=sflag, size = 0x4, scoped, tag = 'scoped memory for tpu_custom_call.1']
    %15 = vsyncpa [#allocation3], 0
    // Predicated region
    $region2: #{tpu_custom_call.1} parent=1 // pred_check
      _
    $region3: #{tpu_custom_call.1} parent=1 // pred_check_branch
      %17 = sbr.rel (0) target = $region5
    $region4: #{tpu_custom_call.1} parent=1 // pred_region
      _
    $region5: #{tpu_custom_call.1} parent=1 // pred_fallthru
      _
    // Predicated region
    $region6: #{tpu_custom_call.1} parent=1 // pred_check
      _
    $region7: #{tpu_custom_call.1} parent=1 // pred_check_branch
      %19 = sbr.rel (0) target = $region9
    $region8: #{tpu_custom_call.1} parent=1 // pred_region
      _
    $region9: #{tpu_custom_call.1} parent=1 // pred_fallthru
      _
    // Predicated region
    $region10: #{tpu_custom_call.1} parent=1 // pred_check
      _
    $region11: #{tpu_custom_call.1} parent=1 // pred_check_branch
      %21 = sbr.rel (0) target = $region13
    $region12: #{tpu_custom_call.1} parent=1 // pred_region
      _
    $region13: #{tpu_custom_call.1} parent=1 // pred_fallthru
      _
    // Predicated region
    $region14: #{tpu_custom_call.1} parent=1 // pred_check
      _
    $region15: #{tpu_custom_call.1} parent=1 // pred_check_branch
      %23 = sbr.rel (0) target = $region17
    $region16: #{tpu_custom_call.1} parent=1 // pred_region
      _
    $region17: #{tpu_custom_call.1} parent=1 // pred_fallthru
      _
    // Predicated region
    $region18: #{tpu_custom_call.1} parent=1 // pred_check
      _
    $region19: #{tpu_custom_call.1} parent=1 // pred_check_branch
      %25 = sbr.rel (0) target = $region21
    $region20: #{tpu_custom_call.1} parent=1 // pred_region
      _
    $region21: #{tpu_custom_call.1} parent=1 // pred_fallthru
      _
    // Predicated region
    $region22: #{tpu_custom_call.1} parent=1 // pred_check
      _
    $region23: #{tpu_custom_call.1} parent=1 // pred_check_branch
      %27 = sbr.rel (0) target = $region25
    $region24: #{tpu_custom_call.1} parent=1 // pred_region
      _
    $region25: #{tpu_custom_call.1} parent=1 // pred_fallthru
      _
    // Predicated region
    $region26: #{tpu_custom_call.1} parent=1 // pred_check
      _
    $region27: #{tpu_custom_call.1} parent=1 // pred_check_branch
      %29 = sbr.rel (0) target = $region29
    $region28: #{tpu_custom_call.1} parent=1 // pred_region
      _
    $region29: #{tpu_custom_call.1} parent=1 // pred_fallthru
      _
    // Predicated region
    $region30: #{tpu_custom_call.1} parent=1 // pred_check
      _
    $region31: #{tpu_custom_call.1} parent=1 // pred_check_branch
      %31 = sbr.rel (0) target = $region33
    $region32: #{tpu_custom_call.1} parent=1 // pred_region
      _
    $region33: #{tpu_custom_call.1} parent=1 // pred_fallthru
      _
    // Predicated region
    $region34: #{tpu_custom_call.1} parent=1 // pred_check
      _
    $region35: #{tpu_custom_call.1} parent=1 // pred_check_branch
      %33 = sbr.rel (0) target = $region37
    $region36: #{tpu_custom_call.1} parent=1 // pred_region
      _
    $region37: #{tpu_custom_call.1} parent=1 // pred_fallthru
      _
    // Predicated region
    $region38: #{tpu_custom_call.1} parent=1 // pred_check
      _
    $region39: #{tpu_custom_call.1} parent=1 // pred_check_branch
      %35 = sbr.rel (0) target = $region41
    $region40: #{tpu_custom_call.1} parent=1 // pred_region
      _
    $region41: #{tpu_custom_call.1} parent=1 // pred_fallthru
      _
    %v36 = vld [vmem:[%s0] sm:$0xff]
    %v37 = vld [vmem:[%s0 + $0x8] sm:$0xf]
    %v38 = vld [vmem:[%s2] sm:$0x1]
    %v39 = vld [vmem:[%s1] sm:$0xff]
    %v40 = vld [vmem:[%s1 + $0x8] sm:$0xf]
    %vm41 = vcmask 97280
    %v43 = vsel %vm41, %v39, 0
    %v46 = vsel %vm41, %v40, 0
    %vm48 = vcmask 1043456
    %v50 = vsel %vm48, %v37, 0
    %52 = vmatprep.subr.mxu0 0.0
    %53 = vmatpush1.msra.mxu0 0.0
    %54 = vmatprep.subr.mxu0 0.0
    %55 = vmatpush1.msra.mxu0 0.0
    %56 = vmatprep.subr.mxu0 0.0
    %57 = vmatpush1.msra.mxu0 0.0
    %58 = vmatprep.subr.mxu0 0.0
    %59 = vmatpush1.msra.mxu0 0.0
    %60 = vmatprep.subr.mxu0 0.0
    %61 = vmatpush1.msra.mxu0 0.0
    %62 = vmatprep.subr.mxu0 0.0
    %63 = vmatpush1.msra.mxu0 0.0
    %64 = vmatprep.subr.mxu0 0.0
    %65 = vmatpush1.msra.mxu0 0.0
    %66 = vmatprep.subr.mxu0 0.0
    %67 = vmatpush1.msra.mxu0 0.0
    %68 = vmatprep.subr.mxu0 0.0
    %69 = vmatpush1.msra.mxu0 0.0
    %70 = vmatprep.subr.mxu0 0.0
    %71 = vmatpush1.msra.mxu0 0.0
    %72 = vmatprep.subr.mxu0 0.0
    %73 = vmatpush1.msra.mxu0 0.0
    %74 = vmatprep.subr.mxu0 0.0
    %75 = vmatpush1.msra.mxu0 0.0
    %76 = vmatprep.subr.mxu0 0.0
    %77 = vmatpush1.msra.mxu0 0.0
    %78 = vmatprep.subr.mxu0 0.0
    %79 = vmatpush1.msra.mxu0 0.0
    %80 = vmatprep.subr.mxu0 0.0
    %81 = vmatpush1.msra.mxu0 %v50
    %82 = vmatprep.subr.mxu0 0.0
    %83 = vmatpush1.msra.mxu0 %v36
    %84 = vmatprep.subr.mxu0 0.0
    %85 = vmatpush2.msra.mxu0 0.0
    %86 = vmatprep.subr.mxu0 0.0
    %87 = vmatpush2.msra.mxu0 0.0
    %88 = vmatprep.subr.mxu0 0.0
    %89 = vmatpush2.msra.mxu0 0.0
    %90 = vmatprep.subr.mxu0 0.0
    %91 = vmatpush2.msra.mxu0 0.0
    %92 = vmatprep.subr.mxu0 0.0
    %93 = vmatpush2.msra.mxu0 0.0
    %94 = vmatprep.subr.mxu0 0.0
    %95 = vmatpush2.msra.mxu0 0.0
    %96 = vmatprep.subr.mxu0 0.0
    %97 = vmatpush2.msra.mxu0 0.0
    %98 = vmatprep.subr.mxu0 0.0
    %99 = vmatpush2.msra.mxu0 0.0
    %100 = vmatprep.subr.mxu0 0.0
    %101 = vmatpush2.msra.mxu0 0.0
    %102 = vmatprep.subr.mxu0 0.0
    %103 = vmatpush2.msra.mxu0 0.0
    %104 = vmatprep.subr.mxu0 0.0
    %105 = vmatpush2.msra.mxu0 0.0
    %106 = vmatprep.subr.mxu0 0.0
    %107 = vmatpush2.msra.mxu0 0.0
    %108 = vmatprep.subr.mxu0 0.0
    %109 = vmatpush2.msra.mxu0 0.0
    %110 = vmatprep.subr.mxu0 0.0
    %111 = vmatpush2.msra.mxu0 0.0
    %112 = vmatprep.subr.mxu0 0.0
    %113 = vmatpush2.msra.mxu0 0.0
    %114 = vmatprep.subr.mxu0 0.0
    %115 = vmatpush2.msra.mxu0 0.0
    %116 = vmatprep.mubr.f32.mxu0 0.0
    %117 = vmatmul.mubr.f32.gmra.mxu0 %v43
    %v118 = vpop.f32.mrf.mxu0
    %v119 = vadd.f32 0.0, %v118
    %v120 = vpop.f32.mrf.mxu0
    %121 = vmatprep.mubr.f32.mxu0 0.0
    %122 = vmatmul.mubr.f32.gmra.mxu0 %v46
    %v123 = vpop.f32.mrf.mxu0
    %v124 = vadd.f32 0.0, %v123
    %v125 = vpop.f32.mrf.mxu0
    %126 = vdwg.mxu0
    %v127 = vmul.f32 %v119, %v119
    %v128 = vmul.f32 %v124, %v124
    %v130 = vsel %vm41, %v38, 0
    %v133 = vsel %vm48, %v128, 0
    %135 = vmatprep.subr.mxu0 0.0
    %136 = vmatpush1.msra.mxu0 0.0
    %137 = vmatprep.subr.mxu0 0.0
    %138 = vmatpush1.msra.mxu0 0.0
    %139 = vmatprep.subr.mxu0 0.0
    %140 = vmatpush1.msra.mxu0 0.0
    %141 = vmatprep.subr.mxu0 0.0
    %142 = vmatpush1.msra.mxu0 0.0
    %143 = vmatprep.subr.mxu0 0.0
    %144 = vmatpush1.msra.mxu0 0.0
    %145 = vmatprep.subr.mxu0 0.0
    %146 = vmatpush1.msra.mxu0 0.0
    %147 = vmatprep.subr.mxu0 0.0
    %148 = vmatpush1.msra.mxu0 0.0
    %149 = vmatprep.subr.mxu0 0.0
    %150 = vmatpush1.msra.mxu0 0.0
    %151 = vmatprep.subr.mxu0 0.0
    %152 = vmatpush1.msra.mxu0 0.0
    %153 = vmatprep.subr.mxu0 0.0
    %154 = vmatpush1.msra.mxu0 0.0
    %155 = vmatprep.subr.mxu0 0.0
    %156 = vmatpush1.msra.mxu0 0.0
    %157 = vmatprep.subr.mxu0 0.0
    %158 = vmatpush1.msra.mxu0 0.0
    %159 = vmatprep.subr.mxu0 0.0
    %160 = vmatpush1.msra.mxu0 0.0
    %161 = vmatprep.subr.mxu0 0.0
    %162 = vmatpush1.msra.mxu0 0.0
    %163 = vmatprep.subr.mxu0 0.0
    %164 = vmatpush1.msra.mxu0 %v133
    %165 = vmatprep.subr.mxu0 0.0
    %166 = vmatpush1.msra.mxu0 %v127
    %167 = vmatprep.subr.mxu0 0.0
    %168 = vmatpush2.msra.mxu0 0.0
    %169 = vmatprep.subr.mxu0 0.0
    %170 = vmatpush2.msra.mxu0 0.0
    %171 = vmatprep.subr.mxu0 0.0
    %172 = vmatpush2.msra.mxu0 0.0
    %173 = vmatprep.subr.mxu0 0.0
    %174 = vmatpush2.msra.mxu0 0.0
    %175 = vmatprep.subr.mxu0 0.0
    %176 = vmatpush2.msra.mxu0 0.0
    %177 = vmatprep.subr.mxu0 0.0
    %178 = vmatpush2.msra.mxu0 0.0
    %179 = vmatprep.subr.mxu0 0.0
    %180 = vmatpush2.msra.mxu0 0.0
    %181 = vmatprep.subr.mxu0 0.0
    %182 = vmatpush2.msra.mxu0 0.0
    %183 = vmatprep.subr.mxu0 0.0
    %184 = vmatpush2.msra.mxu0 0.0
    %185 = vmatprep.subr.mxu0 0.0
    %186 = vmatpush2.msra.mxu0 0.0
    %187 = vmatprep.subr.mxu0 0.0
    %188 = vmatpush2.msra.mxu0 0.0
    %189 = vmatprep.subr.mxu0 0.0
    %190 = vmatpush2.msra.mxu0 0.0
    %191 = vmatprep.subr.mxu0 0.0
    %192 = vmatpush2.msra.mxu0 0.0
    %193 = vmatprep.subr.mxu0 0.0
    %194 = vmatpush2.msra.mxu0 0.0
    %195 = vmatprep.subr.mxu0 0.0
    %196 = vmatpush2.msra.mxu0 0.0
    %197 = vmatprep.subr.mxu0 0.0
    %198 = vmatpush2.msra.mxu0 0.0
    %199 = vmatprep.mubr.f32.mxu0 0.0
    %200 = vmatmul.mubr.f32.gmra.mxu0 %v130
    %v201 = vpop.f32.mrf.mxu0
    %v202 = vadd.f32 1e-06, %v201
    %v203 = vpop.f32.mrf.mxu0
    %204 = vdwg.mxu0
    %v205 = vrsqrt.pop %v202
    %v206 = vlaneseq
    %v207 = vshrl.u32 %v206, 7
    %v208 = vsub.s32 0, %v207
    %v209 = vrot.slane %v205, %v208
    %v210 = vmul.f32 %v119, %v209
    %v211 = vmul.f32 %v124, %v209
    %v212 = vld [vmem:[%s3] sm:$0xff]
    %v213 = vld [vmem:[%s3 + $0x8] sm:$0xff]
    %v214 = vld [vmem:[%s3 + $0x10] sm:$0xff]
    %v215 = vld [vmem:[%s4] sm:$0xff]
    %v216 = vld [vmem:[%s4 + $0x8] sm:$0xff]
    %v217 = vld [vmem:[%s4 + $0x10] sm:$0xff]
    %219 = vset.pattern.permute.xlu0 0
    %220 = vperm.xlu0 %219, %v215
    %v221 = vpop.permute.xlu0 %220
    %224 = vset.pattern.permute.xlu0 0
    %225 = vperm.xlu0 %224, %v216
    %v226 = vpop.permute.xlu0 %225
    %229 = vset.pattern.permute.xlu0 0
    %230 = vperm.xlu0 %229, %v217
    %v231 = vpop.permute.xlu0 %230
    %v234 = vsel %vm41, %v212, 0
    %v237 = vsel %vm41, %v213, 0
    %v240 = vsel %vm41, %v214, 0
    %v243 = vsel %vm48, %v211, 0
    %245 = vmatprep.subr.mxu0 0.0
    %246 = vmatpush1.msra.mxu0 0.0
    %247 = vmatprep.subr.mxu0 0.0
    %248 = vmatpush1.msra.mxu0 0.0
    %249 = vmatprep.subr.mxu0 0.0
    %250 = vmatpush1.msra.mxu0 0.0
    %251 = vmatprep.subr.mxu0 0.0
    %252 = vmatpush1.msra.mxu0 0.0
    %253 = vmatprep.subr.mxu0 0.0
    %254 = vmatpush1.msra.mxu0 0.0
    %255 = vmatprep.subr.mxu0 0.0
    %256 = vmatpush1.msra.mxu0 0.0
    %257 = vmatprep.subr.mxu0 0.0
    %258 = vmatpush1.msra.mxu0 0.0
    %259 = vmatprep.subr.mxu0 0.0
    %260 = vmatpush1.msra.mxu0 0.0
    %261 = vmatprep.subr.mxu0 0.0
    %262 = vmatpush1.msra.mxu0 0.0
    %263 = vmatprep.subr.mxu0 0.0
    %264 = vmatpush1.msra.mxu0 0.0
    %265 = vmatprep.subr.mxu0 0.0
    %266 = vmatpush1.msra.mxu0 0.0
    %267 = vmatprep.subr.mxu0 0.0
    %268 = vmatpush1.msra.mxu0 0.0
    %269 = vmatprep.subr.mxu0 0.0
    %270 = vmatpush1.msra.mxu0 0.0
    %271 = vmatprep.subr.mxu0 0.0
    %272 = vmatpush1.msra.mxu0 0.0
    %273 = vmatprep.subr.mxu0 0.0
    %274 = vmatpush1.msra.mxu0 %v243
    %275 = vmatprep.subr.mxu0 0.0
    %276 = vmatpush1.msra.mxu0 %v210
    %277 = vmatprep.subr.mxu0 0.0
    %278 = vmatpush2.msra.mxu0 0.0
    %279 = vmatprep.subr.mxu0 0.0
    %280 = vmatpush2.msra.mxu0 0.0
    %281 = vmatprep.subr.mxu0 0.0
    %282 = vmatpush2.msra.mxu0 0.0
    %283 = vmatprep.subr.mxu0 0.0
    %284 = vmatpush2.msra.mxu0 0.0
    %285 = vmatprep.subr.mxu0 0.0
    %286 = vmatpush2.msra.mxu0 0.0
    %287 = vmatprep.subr.mxu0 0.0
    %288 = vmatpush2.msra.mxu0 0.0
    %289 = vmatprep.subr.mxu0 0.0
    %290 = vmatpush2.msra.mxu0 0.0
    %291 = vmatprep.subr.mxu0 0.0
    %292 = vmatpush2.msra.mxu0 0.0
    %293 = vmatprep.subr.mxu0 0.0
    %294 = vmatpush2.msra.mxu0 0.0
    %295 = vmatprep.subr.mxu0 0.0
    %296 = vmatpush2.msra.mxu0 0.0
    %297 = vmatprep.subr.mxu0 0.0
    %298 = vmatpush2.msra.mxu0 0.0
    %299 = vmatprep.subr.mxu0 0.0
    %300 = vmatpush2.msra.mxu0 0.0
    %301 = vmatprep.subr.mxu0 0.0
    %302 = vmatpush2.msra.mxu0 0.0
    %303 = vmatprep.subr.mxu0 0.0
    %304 = vmatpush2.msra.mxu0 0.0
    %305 = vmatprep.subr.mxu0 0.0
    %306 = vmatpush2.msra.mxu0 0.0
    %307 = vmatprep.subr.mxu0 0.0
    %308 = vmatpush2.msra.mxu0 0.0
    %309 = vmatprep.mubr.f32.mxu0 0.0
    %310 = vmatmul.mubr.f32.gmra.mxu0 %v234
    %v311 = vpop.f32.mrf.mxu0
    %v312 = vadd.f32 %v221, %v311
    %v313 = vpop.f32.mrf.mxu0
    %314 = vmatprep.mubr.f32.mxu0 0.0
    %315 = vmatmul.mubr.f32.gmra.mxu0 %v237
    %v316 = vpop.f32.mrf.mxu0
    %v317 = vadd.f32 %v226, %v316
    %v318 = vpop.f32.mrf.mxu0
    %319 = vmatprep.mubr.f32.mxu0 0.0
    %320 = vmatmul.mubr.f32.gmra.mxu0 %v240
    %v321 = vpop.f32.mrf.mxu0
    %v322 = vadd.f32 %v231, %v321
    %v323 = vpop.f32.mrf.mxu0
    %324 = vdwg.mxu0
    %v325 = vmax.f32 %v312, 0.0
    %v326 = vmax.f32 %v317, 0.0
    %v327 = vmax.f32 %v322, 0.0
    %v328 = vld [vmem:[%s5] sm:$0xff]
    %v329 = vld [vmem:[%s5 + $0x8] sm:$0xf]
    %vm330 = vcmask 195584
    %v332 = vsel %vm330, %v328, 0
    %v335 = vsel %vm330, %v329, 0
    %337 = vmatprep.subr.mxu0 0.0
    %338 = vmatpush1.msra.mxu0 0.0
    %339 = vmatprep.subr.mxu0 0.0
    %340 = vmatpush1.msra.mxu0 0.0
    %341 = vmatprep.subr.mxu0 0.0
    %342 = vmatpush1.msra.mxu0 0.0
    %343 = vmatprep.subr.mxu0 0.0
    %344 = vmatpush1.msra.mxu0 0.0
    %345 = vmatprep.subr.mxu0 0.0
    %346 = vmatpush1.msra.mxu0 0.0
    %347 = vmatprep.subr.mxu0 0.0
    %348 = vmatpush1.msra.mxu0 0.0
    %349 = vmatprep.subr.mxu0 0.0
    %350 = vmatpush1.msra.mxu0 0.0
    %351 = vmatprep.subr.mxu0 0.0
    %352 = vmatpush1.msra.mxu0 0.0
    %353 = vmatprep.subr.mxu0 0.0
    %354 = vmatpush1.msra.mxu0 0.0
    %355 = vmatprep.subr.mxu0 0.0
    %356 = vmatpush1.msra.mxu0 0.0
    %357 = vmatprep.subr.mxu0 0.0
    %358 = vmatpush1.msra.mxu0 0.0
    %359 = vmatprep.subr.mxu0 0.0
    %360 = vmatpush1.msra.mxu0 0.0
    %361 = vmatprep.subr.mxu0 0.0
    %362 = vmatpush1.msra.mxu0 0.0
    %363 = vmatprep.subr.mxu0 0.0
    %364 = vmatpush1.msra.mxu0 %v327
    %365 = vmatprep.subr.mxu0 0.0
    %366 = vmatpush1.msra.mxu0 %v326
    %367 = vmatprep.subr.mxu0 0.0
    %368 = vmatpush1.msra.mxu0 %v325
    %369 = vmatprep.subr.mxu0 0.0
    %370 = vmatpush2.msra.mxu0 0.0
    %371 = vmatprep.subr.mxu0 0.0
    %372 = vmatpush2.msra.mxu0 0.0
    %373 = vmatprep.subr.mxu0 0.0
    %374 = vmatpush2.msra.mxu0 0.0
    %375 = vmatprep.subr.mxu0 0.0
    %376 = vmatpush2.msra.mxu0 0.0
    %377 = vmatprep.subr.mxu0 0.0
    %378 = vmatpush2.msra.mxu0 0.0
    %379 = vmatprep.subr.mxu0 0.0
    %380 = vmatpush2.msra.mxu0 0.0
    %381 = vmatprep.subr.mxu0 0.0
    %382 = vmatpush2.msra.mxu0 0.0
    %383 = vmatprep.subr.mxu0 0.0
    %384 = vmatpush2.msra.mxu0 0.0
    %385 = vmatprep.subr.mxu0 0.0
    %386 = vmatpush2.msra.mxu0 0.0
    %387 = vmatprep.subr.mxu0 0.0
    %388 = vmatpush2.msra.mxu0 0.0
    %389 = vmatprep.subr.mxu0 0.0
    %390 = vmatpush2.msra.mxu0 0.0
    %391 = vmatprep.subr.mxu0 0.0
    %392 = vmatpush2.msra.mxu0 0.0
    %393 = vmatprep.subr.mxu0 0.0
    %394 = vmatpush2.msra.mxu0 0.0
    %395 = vmatprep.subr.mxu0 0.0
    %396 = vmatpush2.msra.mxu0 0.0
    %397 = vmatprep.subr.mxu0 0.0
    %398 = vmatpush2.msra.mxu0 0.0
    %399 = vmatprep.subr.mxu0 0.0
    %400 = vmatpush2.msra.mxu0 0.0
    %401 = vmatprep.mubr.f32.mxu0 0.0
    %402 = vmatmul.mubr.f32.gmra.mxu0 %v332
    %v403 = vpop.f32.mrf.mxu0
    %v404 = vadd.f32 0.0, %v403
    %v405 = vpop.f32.mrf.mxu0
    %406 = vmatprep.mubr.f32.mxu0 0.0
    %407 = vmatmul.mubr.f32.gmra.mxu0 %v335
    %v408 = vpop.f32.mrf.mxu0
    %v409 = vadd.f32 0.0, %v408
    %v410 = vpop.f32.mrf.mxu0
    %411 = vdwg.mxu0
    %v412 = vxor.u32 %v404, 2147483648
    %v413 = vxor.u32 %v409, 2147483648
    %v414 = vmul.f32 %v412, 1.442695
    %v415 = vpow.pop %v414
    %v416 = vmul.f32 %v413, 1.442695
    %v417 = vpow.pop %v416
    %v418 = vadd.f32 %v415, 1.0
    %v419 = vadd.f32 %v417, 1.0
    %v420 = vrcp.pop %v418
    %v421 = vmul.f32 1.0, %v420
    %v422 = vrcp.pop %v419
    %v423 = vmul.f32 1.0, %v422
    %v425 = vsel %vm48, %v423, 0
    %427 = vmatprep.subr.mxu0 0.0
    %428 = vmatpush1.msra.mxu0 0.0
    %429 = vmatprep.subr.mxu0 0.0
    %430 = vmatpush1.msra.mxu0 0.0
    %431 = vmatprep.subr.mxu0 0.0
    %432 = vmatpush1.msra.mxu0 0.0
    %433 = vmatprep.subr.mxu0 0.0
    %434 = vmatpush1.msra.mxu0 0.0
    %435 = vmatprep.subr.mxu0 0.0
    %436 = vmatpush1.msra.mxu0 0.0
    %437 = vmatprep.subr.mxu0 0.0
    %438 = vmatpush1.msra.mxu0 0.0
    %439 = vmatprep.subr.mxu0 0.0
    %440 = vmatpush1.msra.mxu0 0.0
    %441 = vmatprep.subr.mxu0 0.0
    %442 = vmatpush1.msra.mxu0 0.0
    %443 = vmatprep.subr.mxu0 0.0
    %444 = vmatpush1.msra.mxu0 0.0
    %445 = vmatprep.subr.mxu0 0.0
    %446 = vmatpush1.msra.mxu0 0.0
    %447 = vmatprep.subr.mxu0 0.0
    %448 = vmatpush1.msra.mxu0 0.0
    %449 = vmatprep.subr.mxu0 0.0
    %450 = vmatpush1.msra.mxu0 0.0
    %451 = vmatprep.subr.mxu0 0.0
    %452 = vmatpush1.msra.mxu0 0.0
    %453 = vmatprep.subr.mxu0 0.0
    %454 = vmatpush1.msra.mxu0 0.0
    %455 = vmatprep.subr.mxu0 0.0
    %456 = vmatpush1.msra.mxu0 %v425
    %457 = vmatprep.subr.mxu0 0.0
    %458 = vmatpush1.msra.mxu0 %v421
    %459 = vmatprep.subr.mxu0 0.0
    %460 = vmatpush2.msra.mxu0 0.0
    %461 = vmatprep.subr.mxu0 0.0
    %462 = vmatpush2.msra.mxu0 0.0
    %463 = vmatprep.subr.mxu0 0.0
    %464 = vmatpush2.msra.mxu0 0.0
    %465 = vmatprep.subr.mxu0 0.0
    %466 = vmatpush2.msra.mxu0 0.0
    %467 = vmatprep.subr.mxu0 0.0
    %468 = vmatpush2.msra.mxu0 0.0
    %469 = vmatprep.subr.mxu0 0.0
    %470 = vmatpush2.msra.mxu0 0.0
    %471 = vmatprep.subr.mxu0 0.0
    %472 = vmatpush2.msra.mxu0 0.0
    %473 = vmatprep.subr.mxu0 0.0
    %474 = vmatpush2.msra.mxu0 0.0
    %475 = vmatprep.subr.mxu0 0.0
    %476 = vmatpush2.msra.mxu0 0.0
    %477 = vmatprep.subr.mxu0 0.0
    %478 = vmatpush2.msra.mxu0 0.0
    %479 = vmatprep.subr.mxu0 0.0
    %480 = vmatpush2.msra.mxu0 0.0
    %481 = vmatprep.subr.mxu0 0.0
    %482 = vmatpush2.msra.mxu0 0.0
    %483 = vmatprep.subr.mxu0 0.0
    %484 = vmatpush2.msra.mxu0 0.0
    %485 = vmatprep.subr.mxu0 0.0
    %486 = vmatpush2.msra.mxu0 0.0
    %487 = vmatprep.subr.mxu0 0.0
    %488 = vmatpush2.msra.mxu0 0.0
    %489 = vmatprep.subr.mxu0 0.0
    %490 = vmatpush2.msra.mxu0 0.0
    %491 = vmatprep.mubr.f32.mxu0 0.0
    %492 = vmatmul.mubr.f32.gmra.mxu0 %v130
    %v493 = vpop.f32.mrf.mxu0
    %v494 = vadd.f32 0.0, %v493
    %v495 = vpop.f32.mrf.mxu0
    %496 = vdwg.mxu0
    %v497 = vlaneseq
    %v498 = vshrl.u32 %v497, 7
    %v499 = vsub.s32 0, %v498
    %v500 = vrot.slane %v494, %v499
    %v501 = vsub.f32 %v421, %v500
    %v502 = vsub.f32 %v423, %v500
    %v503 = vmul.f32 %v501, %v501
    %v504 = vmul.f32 %v502, %v502
    %v506 = vsel %vm48, %v504, 0
    %508 = vmatprep.subr.mxu0 0.0
    %509 = vmatpush1.msra.mxu0 0.0
    %510 = vmatprep.subr.mxu0 0.0
    %511 = vmatpush1.msra.mxu0 0.0
    %512 = vmatprep.subr.mxu0 0.0
    %513 = vmatpush1.msra.mxu0 0.0
    %514 = vmatprep.subr.mxu0 0.0
    %515 = vmatpush1.msra.mxu0 0.0
    %516 = vmatprep.subr.mxu0 0.0
    %517 = vmatpush1.msra.mxu0 0.0
    %518 = vmatprep.subr.mxu0 0.0
    %519 = vmatpush1.msra.mxu0 0.0
    %520 = vmatprep.subr.mxu0 0.0
    %521 = vmatpush1.msra.mxu0 0.0
    %522 = vmatprep.subr.mxu0 0.0
    %523 = vmatpush1.msra.mxu0 0.0
    %524 = vmatprep.subr.mxu0 0.0
    %525 = vmatpush1.msra.mxu0 0.0
    %526 = vmatprep.subr.mxu0 0.0
    %527 = vmatpush1.msra.mxu0 0.0
    %528 = vmatprep.subr.mxu0 0.0
    %529 = vmatpush1.msra.mxu0 0.0
    %530 = vmatprep.subr.mxu0 0.0
    %531 = vmatpush1.msra.mxu0 0.0
    %532 = vmatprep.subr.mxu0 0.0
    %533 = vmatpush1.msra.mxu0 0.0
    %534 = vmatprep.subr.mxu0 0.0
    %535 = vmatpush1.msra.mxu0 0.0
    %536 = vmatprep.subr.mxu0 0.0
    %537 = vmatpush1.msra.mxu0 %v506
    %538 = vmatprep.subr.mxu0 0.0
    %539 = vmatpush1.msra.mxu0 %v503
    %540 = vmatprep.subr.mxu0 0.0
    %541 = vmatpush2.msra.mxu0 0.0
    %542 = vmatprep.subr.mxu0 0.0
    %543 = vmatpush2.msra.mxu0 0.0
    %544 = vmatprep.subr.mxu0 0.0
    %545 = vmatpush2.msra.mxu0 0.0
    %546 = vmatprep.subr.mxu0 0.0
    %547 = vmatpush2.msra.mxu0 0.0
    %548 = vmatprep.subr.mxu0 0.0
    %549 = vmatpush2.msra.mxu0 0.0
    %550 = vmatprep.subr.mxu0 0.0
    %551 = vmatpush2.msra.mxu0 0.0
    %552 = vmatprep.subr.mxu0 0.0
    %553 = vmatpush2.msra.mxu0 0.0
    %554 = vmatprep.subr.mxu0 0.0
    %555 = vmatpush2.msra.mxu0 0.0
    %556 = vmatprep.subr.mxu0 0.0
    %557 = vmatpush2.msra.mxu0 0.0
    %558 = vmatprep.subr.mxu0 0.0
    %559 = vmatpush2.msra.mxu0 0.0
    %560 = vmatprep.subr.mxu0 0.0
    %561 = vmatpush2.msra.mxu0 0.0
    %562 = vmatprep.subr.mxu0 0.0
    %563 = vmatpush2.msra.mxu0 0.0
    %564 = vmatprep.subr.mxu0 0.0
    %565 = vmatpush2.msra.mxu0 0.0
    %566 = vmatprep.subr.mxu0 0.0
    %567 = vmatpush2.msra.mxu0 0.0
    %568 = vmatprep.subr.mxu0 0.0
    %569 = vmatpush2.msra.mxu0 0.0
    %570 = vmatprep.subr.mxu0 0.0
    %571 = vmatpush2.msra.mxu0 0.0
    %572 = vmatprep.mubr.f32.mxu0 0.0
    %573 = vmatmul.mubr.f32.gmra.mxu0 %v130
    %v574 = vpop.f32.mrf.mxu0
    %v575 = vadd.f32 1e-06, %v574
    %v576 = vpop.f32.mrf.mxu0
    %577 = vdwg.mxu0
    %v578 = vrsqrt.pop %v575
    %v579 = vlaneseq
    %v580 = vshrl.u32 %v579, 7
    %v581 = vsub.s32 0, %v580
    %v582 = vrot.slane %v578, %v581
    %v583 = vmul.f32 %v501, %v582
    %v584 = vmul.f32 %v502, %v582
    %v585 = vld [vmem:[%s6] sm:$0xff]
    %v586 = vld [vmem:[%s6 + $0x8] sm:$0xf]
    %588 = vset.pattern.permute.xlu0 0
    %589 = vperm.xlu0 %588, %v585
    %v590 = vpop.permute.xlu0 %589
    %593 = vset.pattern.permute.xlu0 0
    %594 = vperm.xlu0 %593, %v586
    %v595 = vpop.permute.xlu0 %594
    %v597 = vmul.f32 %v583, %v590
    %v598 = vmul.f32 %v584, %v595
    %v599 = vld [vmem:[%s7] sm:$0xff]
    %v600 = vld [vmem:[%s7 + $0x8] sm:$0xf]
    %602 = vset.pattern.permute.xlu0 0
    %603 = vperm.xlu0 %602, %v599
    %v604 = vpop.permute.xlu0 %603
    %607 = vset.pattern.permute.xlu0 0
    %608 = vperm.xlu0 %607, %v600
    %v609 = vpop.permute.xlu0 %608
    %v611 = vadd.f32 %v597, %v604
    %v612 = vadd.f32 %v598, %v609
    %v613 = vld [vmem:[%s8] sm:$0xff]
    %v614 = vld [vmem:[%s8 + $0x8] sm:$0xf]
    %v615 = vmul.f32 %v36, %v611
    %v616 = vmul.f32 %v37, %v612
    %v617 = vld [vmem:[%s9] sm:$0xff]
    %v618 = vld [vmem:[%s9 + $0x8] sm:$0xf]
    %620 = vset.pattern.permute.xlu0 0
    %621 = vperm.xlu0 %620, %v617
    %v622 = vpop.permute.xlu0 %621
    %625 = vset.pattern.permute.xlu0 0
    %626 = vperm.xlu0 %625, %v618
    %v627 = vpop.permute.xlu0 %626
    %v630 = vsel %vm41, %v613, 0
    %v633 = vsel %vm41, %v614, 0
    %v636 = vsel %vm48, %v616, 0
    %638 = vmatprep.subr.mxu0 0.0
    %639 = vmatpush1.msra.mxu0 0.0
    %640 = vmatprep.subr.mxu0 0.0
    %641 = vmatpush1.msra.mxu0 0.0
    %642 = vmatprep.subr.mxu0 0.0
    %643 = vmatpush1.msra.mxu0 0.0
    %644 = vmatprep.subr.mxu0 0.0
    %645 = vmatpush1.msra.mxu0 0.0
    %646 = vmatprep.subr.mxu0 0.0
    %647 = vmatpush1.msra.mxu0 0.0
    %648 = vmatprep.subr.mxu0 0.0
    %649 = vmatpush1.msra.mxu0 0.0
    %650 = vmatprep.subr.mxu0 0.0
    %651 = vmatpush1.msra.mxu0 0.0
    %652 = vmatprep.subr.mxu0 0.0
    %653 = vmatpush1.msra.mxu0 0.0
    %654 = vmatprep.subr.mxu0 0.0
    %655 = vmatpush1.msra.mxu0 0.0
    %656 = vmatprep.subr.mxu0 0.0
    %657 = vmatpush1.msra.mxu0 0.0
    %658 = vmatprep.subr.mxu0 0.0
    %659 = vmatpush1.msra.mxu0 0.0
    %660 = vmatprep.subr.mxu0 0.0
    %661 = vmatpush1.msra.mxu0 0.0
    %662 = vmatprep.subr.mxu0 0.0
    %663 = vmatpush1.msra.mxu0 0.0
    %664 = vmatprep.subr.mxu0 0.0
    %665 = vmatpush1.msra.mxu0 0.0
    %666 = vmatprep.subr.mxu0 0.0
    %667 = vmatpush1.msra.mxu0 %v636
    %668 = vmatprep.subr.mxu0 0.0
    %669 = vmatpush1.msra.mxu0 %v615
    %670 = vmatprep.subr.mxu0 0.0
    %671 = vmatpush2.msra.mxu0 0.0
    %672 = vmatprep.subr.mxu0 0.0
    %673 = vmatpush2.msra.mxu0 0.0
    %674 = vmatprep.subr.mxu0 0.0
    %675 = vmatpush2.msra.mxu0 0.0
    %676 = vmatprep.subr.mxu0 0.0
    %677 = vmatpush2.msra.mxu0 0.0
    %678 = vmatprep.subr.mxu0 0.0
    %679 = vmatpush2.msra.mxu0 0.0
    %680 = vmatprep.subr.mxu0 0.0
    %681 = vmatpush2.msra.mxu0 0.0
    %682 = vmatprep.subr.mxu0 0.0
    %683 = vmatpush2.msra.mxu0 0.0
    %684 = vmatprep.subr.mxu0 0.0
    %685 = vmatpush2.msra.mxu0 0.0
    %686 = vmatprep.subr.mxu0 0.0
    %687 = vmatpush2.msra.mxu0 0.0
    %688 = vmatprep.subr.mxu0 0.0
    %689 = vmatpush2.msra.mxu0 0.0
    %690 = vmatprep.subr.mxu0 0.0
    %691 = vmatpush2.msra.mxu0 0.0
    %692 = vmatprep.subr.mxu0 0.0
    %693 = vmatpush2.msra.mxu0 0.0
    %694 = vmatprep.subr.mxu0 0.0
    %695 = vmatpush2.msra.mxu0 0.0
    %696 = vmatprep.subr.mxu0 0.0
    %697 = vmatpush2.msra.mxu0 0.0
    %698 = vmatprep.subr.mxu0 0.0
    %699 = vmatpush2.msra.mxu0 0.0
    %700 = vmatprep.subr.mxu0 0.0
    %701 = vmatpush2.msra.mxu0 0.0
    %702 = vmatprep.mubr.f32.mxu0 0.0
    %703 = vmatmul.mubr.f32.gmra.mxu0 %v630
    %v704 = vpop.f32.mrf.mxu0
    %v705 = vadd.f32 %v622, %v704
    %v706 = vpop.f32.mrf.mxu0
    %707 = vmatprep.mubr.f32.mxu0 0.0
    %708 = vmatmul.mubr.f32.gmra.mxu0 %v633
    %v709 = vpop.f32.mrf.mxu0
    %v710 = vadd.f32 %v627, %v709
    %v711 = vpop.f32.mrf.mxu0
    %712 = vdwg.mxu0
    %713 = vst [vmem:[#allocation2] sm:$0xff] %v705
    %714 = vst [vmem:[#allocation2 + $0x8] sm:$0xf] %v710
    // Predicated region
    $region42: #{tpu_custom_call.1} parent=1 // pred_check
      _
    $region43: #{tpu_custom_call.1} parent=1 // pred_check_branch
      %716 = sbr.rel (0) target = $region45
    $region44: #{tpu_custom_call.1} parent=1 // pred_region
      %s718 = ssub.s32 256, 256
      %719 = vsyncadd [#allocation3], %s718
      %s720 = sshll.u32 [#allocation2], 4
      %s721 = int_to_ptr.vmem [resolvable:$true] %s720
      %726 = dma.vmem_to_hbm [thread:$0]  %s721, 256, %s10, [#allocation3], 128, 128, 8
    $region45: #{tpu_custom_call.1} parent=1 // pred_fallthru
      _
    // Predicated region
    $region46: #{tpu_custom_call.1} parent=1 // pred_check
      _
    $region47: #{tpu_custom_call.1} parent=1 // pred_check_branch
      %728 = sbr.rel (0) target = $region49
    $region48: #{tpu_custom_call.1} parent=1 // pred_region
      %729 = dma.done [#allocation3], 256
    $region49: #{tpu_custom_call.1} parent=1 // pred_fallthru
      _
    %730 = vsyncpa [#allocation3], 1

</llo_original>
